<compile_context>
chip_gen: v6e
topology: v6e:2x2x1
jax: 0.10.0
libtpu: 0.0.40
codegen_flags: <defaults>
</compile_context>

<pallas_src>
import functools
import math

import jax
import jax.numpy as jnp
from jax.experimental import pallas as pl
from jax.experimental.pallas import tpu as pltpu


def _round_up(x, m):
    return -(-x // m) * m


def _pick_tile_target_bytes():
    """Generation-aware output tile target (bytes)."""
    try:
        vmem = pltpu.get_tpu_info().vmem_capacity_bytes
    except Exception:  # trace-time query unavailable -> safe default
        vmem = 128 << 20
    if vmem <= (64 << 20):
        # v7x: 64 MiB physical VMEM per TC but fastest HBM -> biggest relative
        # win from large tiles; double-buffered 2*10 MiB stays well under it.
        return 10 << 20
    # v5e / v6e (128 MiB VMEM).
    return 8 << 20


def _simplex_constant_kernel(c_ref, o_ref, *, k):
    # c_ref: (1, D)   learned constant vector (VMEM, resident across the grid)
    # o_ref: (TB, k*D) lane-dense output tile
    c = c_ref[...].astype(jnp.float32)                        # (1, D)
    # numerically stable softmax along the lane (last) axis
    m = jnp.max(c, axis=-1, keepdims=True)                    # (1, 1)  XLU
    e = jnp.exp(c - m)                                        # (1, D)  EUP
    denom = jnp.sum(e, axis=-1, keepdims=True)                # (1, 1)  XLU
    p = e * pl.reciprocal(denom, approx=False)                # (1, D)
    # cast BEFORE the broadcast: no per-tile whole-block cast/pack work
    row = (jnp.tile(p, (1, k)) if k > 1 else p).astype(o_ref.dtype)  # (1, k*D)
    o_ref[...] = jnp.broadcast_to(row, o_ref.shape)


def simplex_constant_forward(x, constant, *, out_dtype=jnp.float32,
                             tile_target_bytes=None):
    """x: (B, D) — only its shape matters.  constant: (D,) learned vector.

    Returns softmax(constant) broadcast to (B, D) in `out_dtype`."""
    B, D = x.shape
    c2d = constant.reshape(1, D).astype(jnp.float32)

    itemsize = jnp.dtype(out_dtype).itemsize
    # native sublane tile of the output dtype: f32 -> 8, bf16 -> 16, i8 -> 32
    sublane = max(8, (32 // itemsize) // 4 * 8)

    # Lane-dense packing: fold k logical rows into one physical row of width
    # k*D (a multiple of 128 lanes).  Only when k is modest and divides B.
    k0 = 128 // math.gcd(D, 128)
    k = k0 if (1 < k0 <= 16 and B % k0 == 0) else 1
    R, C = B // k, k * D

    if tile_target_bytes is None:
        tile_target_bytes = _pick_tile_target_bytes()
    row_bytes = C * itemsize

    # Row-tile size.  The last block dim is always the full C extent (legal
    # even when C % 128 != 0); the row dim must be a multiple of the dtype's
    # sublane tile, or the full extent R.
    if R <= sublane:
        tb = R
    else:
        tb = max(1, tile_target_bytes // row_bytes)
        tb = max(sublane, (tb // sublane) * sublane)
        tb = min(tb, R)
        if tb < R:
            # prefer an even step count so v7x's two TCs get balanced halves
            steps = -(-R // tb)
            if steps % 2 == 1:
                tb_even = min(R, max(sublane,
                                     _round_up(-(-R // (steps + 1)), sublane)))
                if tb_even < R and (-(-R // tb_even)) % 2 == 0:
                    tb = tb_even
    grid = (pl.cdiv(R, tb),)

    # Scoped-VMEM budget: double-buffered output tile + double-buffered
    # constant + generous slack, so large tiles never hit the per-generation
    # scoped-VMEM default (v5e 16 MiB) while staying far below v7x's 64 MiB
    # physical ceiling.
    const_bytes = 8 * _round_up(D, 128) * 4
    vmem_limit = min(2 * tb * row_bytes + 2 * const_bytes + (16 << 20),
                     48 << 20)

    out_packed = pl.pallas_call(
        functools.partial(_simplex_constant_kernel, k=k),
        out_shape=jax.ShapeDtypeStruct((R, C), out_dtype),
        grid_spec=pltpu.PrefetchScalarGridSpec(
            num_scalar_prefetch=0,
            grid=grid,
            in_specs=[pl.BlockSpec((1, D), lambda i: (0, 0))],   # resident constant
            out_specs=pl.BlockSpec((tb, C), lambda i: (i, 0)),
        ),
        compiler_params=pltpu.CompilerParams(
            # Row tiles are independent -> megacore-shard them on v7x.
            dimension_semantics=("parallel",),
            vmem_limit_bytes=int(vmem_limit)),
    )(c2d)

    # Packed (B//k, k*D) row-major is bit-identical to (B, D) row-major.
    return out_packed.reshape(B, D)


if __name__ == "__main__":
    key = jax.random.PRNGKey(0)
    k_x, k_c = jax.random.split(key)

    # 1) Small shapes consistent with the module (batch=2, data_dim=32).
    batch, data_dim = 2, 32
    x = jax.random.normal(k_x, (batch, data_dim), dtype=jnp.float32)
    # deterministic init of the learned constant vector (nn.Parameter analogue)
    constant = jax.random.normal(k_c, (data_dim,), dtype=jnp.float32)

    out = jax.block_until_ready(simplex_constant_forward(x, constant))
    ref = jnp.broadcast_to(jax.nn.softmax(constant)[None, :], (batch, data_dim))
    assert out.shape == (batch, data_dim)
    assert out.dtype == jnp.float32
    assert jnp.allclose(out, ref, atol=1e-6, rtol=1e-6)
    assert jnp.allclose(jnp.sum(out, axis=-1), jnp.ones((batch,)), atol=1e-6)

    # 2) Exercise the lane-dense packed + multi-tile + parallel path:
    #    D=96 -> 4 logical rows per 384-lane physical row; a tiny tile target
    #    forces a 2-step grid (tb = 8 packed rows).
    b2, d2 = 64, 96
    x2 = jax.random.normal(k_x, (b2, d2), dtype=jnp.float32)
    c2 = jax.random.normal(k_c, (d2,), dtype=jnp.float32)
    out2 = jax.block_until_ready(
        simplex_constant_forward(x2, c2, tile_target_bytes=8 * 96 * 4 * 4))
    ref2 = jnp.broadcast_to(jax.nn.softmax(c2)[None, :], (b2, d2))
    assert out2.shape == (b2, d2)
    assert jnp.allclose(out2, ref2, atol=1e-6, rtol=1e-6)
    assert jnp.allclose(jnp.sum(out2, axis=-1), jnp.ones((b2,)), atol=1e-6)

    # 3) bf16 output path (dtype-aware sublane alignment, cast-before-broadcast).
    b3, d3 = 48, 128
    x3 = jax.random.normal(k_x, (b3, d3), dtype=jnp.float32)
    c3 = jax.random.normal(k_c, (d3,), dtype=jnp.float32)
    out3 = jax.block_until_ready(
        simplex_constant_forward(x3, c3, out_dtype=jnp.bfloat16))
    ref3 = jnp.broadcast_to(jax.nn.softmax(c3)[None, :], (b3, d3))
    assert out3.shape == (b3, d3)
    assert out3.dtype == jnp.bfloat16
    assert jnp.allclose(out3.astype(jnp.float32), ref3, atol=1e-2, rtol=1e-2)

    print("KERNEL_OK")
</pallas_src>

<mosaic_0001>
module attributes {stable_mosaic.version = 11 : i64} {
  func.func @_simplex_constant_kernel(%arg0: i32, %arg1: memref<1x32xf32, #tpu.memory_space<vmem>>, %arg2: memref<2x32xf32, #tpu.memory_space<vmem>>) attributes {dimension_semantics = [#tpu.dimension_semantics<parallel>], iteration_bounds = array<i64: 1>, scalar_prefetch = 0 : i64, scratch_operands = 0 : i64, tpu.core_type = #tpu.core_type<tc>, window_params = [{pipeline_mode = #tpu.pipeline_mode<synchronous>, transform_indices = @transform_0, window_bounds = array<i64: 1, 32>}, {transform_indices = @transform_1, window_bounds = array<i64: 2, 32>}]} {
    %c0 = arith.constant 0 : index
    %c0_0 = arith.constant 0 : index
    %0 = vector.load %arg1[%c0, %c0_0] : memref<1x32xf32, #tpu.memory_space<vmem>>, vector<1x32xf32>
    %cst = arith.constant dense<0xFF800000> : vector<1xf32>
    %1 = vector.multi_reduction <maximumf>, %0, %cst [1] : vector<1x32xf32> to vector<1xf32>
    %2 = vector.shape_cast %1 : vector<1xf32> to vector<1x1xf32>
    %3 = vector.broadcast %2 : vector<1x1xf32> to vector<1x32xf32>
    %4 = arith.subf %0, %3 : vector<1x32xf32>
    %5 = math.exp %4 : vector<1x32xf32>
    %cst_1 = arith.constant dense<0.000000e+00> : vector<1xf32>
    %6 = vector.multi_reduction <add>, %5, %cst_1 [1] : vector<1x32xf32> to vector<1xf32>
    %7 = vector.shape_cast %6 : vector<1xf32> to vector<1x1xf32>
    %8 = tpu.reciprocal %7 : vector<1x1xf32> -> vector<1x1xf32>
    %9 = vector.broadcast %8 : vector<1x1xf32> to vector<1x32xf32>
    %10 = arith.mulf %5, %9 : vector<1x32xf32>
    %11 = vector.shape_cast %10 : vector<1x32xf32> to vector<1x32xf32>
    %12 = vector.broadcast %11 : vector<1x32xf32> to vector<2x32xf32>
    %c0_2 = arith.constant 0 : index
    %c0_3 = arith.constant 0 : index
    %13 = vector.load %arg2[%c0_2, %c0_3] : memref<2x32xf32, #tpu.memory_space<vmem>>, vector<2x32xf32>
    tpu.vector_store %arg2[%c0_2, %c0_3], %12 {strides = array<i32>} : memref<2x32xf32, #tpu.memory_space<vmem>>, vector<2x32xf32>,
    return
  }
  func.func @transform_0(%arg0: i32) -> (i32, i32) {
    %c0_i32 = arith.constant 0 : i32
    %c0_i32_0 = arith.constant 0 : i32
    %c0_i32_1 = arith.constant 0 : i32
    return %c0_i32, %c0_i32_0 : i32, i32
  }
  func.func @transform_1(%arg0: i32) -> (i32, i32) {
    %c0_i32 = arith.constant 0 : i32
    %c0_i32_0 = arith.constant 0 : i32
    return %arg0, %c0_i32 : i32, i32
  }
}

</mosaic_0001>

<llo_original>
// kernel: tpu_custom_call.1
$region0: #{tpu_custom_call.1}
  #allocation0 [shape = 'u32[]', space=smem, size = 0x4, offset = 0x4, fixed_abs, tag = 'smem constant byte address 0x4 - core index']
  #allocation1 [shape = 'u32[144,128]{1,0:T(1,128)}', space=vmem, size = 0x12000, scoped, tag = 'internal scratch']
  %s0 = inlined_call_operand.hbm [shape: f32[1,32], index: 0, kind: input, shape index: {}]
  %s1 = inlined_call_operand.hbm [shape: f32[2,32], index: 1, kind: output, shape index: {}]
  %s2 = sld [smem:[#allocation0]]
  $region18: #{tpu_custom_call.1} parent=0
    _
  %s4 = ssub.s32 1, %s2
  %s5 = scalar_select 0, %s4, %s2
  $region1: #{tpu_custom_call.1} parent=0
    #allocation2 [shape = 'u8[512]{0}', space=vmem, size = 0x400, scoped, tag = 'input window, operand 0, single buffered']
    #allocation3 [shape = 's32[1]{0}', space=sflag, size = 0x4, scoped, tag = 'scoped memory for tpu_custom_call.1']
    #allocation4 [shape = 's32[1]{0}', space=sflag, size = 0x4, scoped, tag = 'scoped memory for tpu_custom_call.1']
    #allocation5 [shape = 'u8[1024]{0}', space=vmem, size = 0x400, scoped, tag = 'output window, operand 0, single buffered']
    %6 = vsyncpa [#allocation3], 0
    %7 = vsyncpa [#allocation4], 0
    // Predicated region
    $region2: #{tpu_custom_call.1} parent=1 // pred_check
      _
    $region3: #{tpu_custom_call.1} parent=1 // pred_check_branch
      %9 = sbr.rel (0) target = $region5
    $region4: #{tpu_custom_call.1} parent=1 // pred_region
      %s11 = ssub.s32 16, 16
      %12 = vsyncadd [#allocation3], %s11
      %s14 = sshll.u32 [#allocation2], 4
      %s15 = int_to_ptr.vmem [resolvable:$true] %s14
      %17 = dma.hbm_to_vmem [thread:$0]  %s0, 16, %s15, [#allocation3]
    $region5: #{tpu_custom_call.1} parent=1 // pred_fallthru
      _
    // Predicated region
    $region6: #{tpu_custom_call.1} parent=1 // pred_check
      _
    $region7: #{tpu_custom_call.1} parent=1 // pred_check_branch
      %19 = sbr.rel (0) target = $region9
    $region8: #{tpu_custom_call.1} parent=1 // pred_region
      %20 = dma.done [#allocation3], 16
    $region9: #{tpu_custom_call.1} parent=1 // pred_fallthru
      _
    %v21 = vld [vmem:[#allocation2] sm:$0x1]
    %vm22 = vcmask 253952
    %v23 = vsel %vm22, %v21, -inf
    %24 = vmax.xlane.f32.xlu0 %v23
    %v25 = vpop.xlane.xlu0 %24
    %v26 = vsub.f32 %v21, %v25
    %v27 = vmul.f32 %v26, 1.442695
    %v28 = vpow.pop %v27
    %v29 = vsel %vm22, %v28, 0.0
    %30 = vadd.xlane.f32.xlu0 %v29
    %v31 = vpop.xlane.xlu0 %30
    %v32 = vrcp.pop %v31
    %v33 = vmul.f32 %v28, %v32
    %v35 = vlaneseq
    %v36 = vshrl.u32 %v35, 7
    %v37 = vsub.s32 0, %v36
    %v38 = vrot.slane %v33, %v37
    %vm40 = vcmask 254976
    %41 = vst.msk [vmem:[#allocation5] sm:$0x3] %vm40, %v38
    // Predicated region
    $region10: #{tpu_custom_call.1} parent=1 // pred_check
      _
    $region11: #{tpu_custom_call.1} parent=1 // pred_check_branch
      %43 = sbr.rel (0) target = $region13
    $region12: #{tpu_custom_call.1} parent=1 // pred_region
      %s45 = ssub.s32 32, 32
      %46 = vsyncadd [#allocation4], %s45
      %s48 = sshll.u32 [#allocation5], 4
      %s49 = int_to_ptr.vmem [resolvable:$true] %s48
      %51 = dma.vmem_to_hbm [thread:$0]  %s49, 32, %s1, [#allocation4]
    $region13: #{tpu_custom_call.1} parent=1 // pred_fallthru
      _
    // Predicated region
    $region14: #{tpu_custom_call.1} parent=1 // pred_check
      _
    $region15: #{tpu_custom_call.1} parent=1 // pred_check_branch
      %53 = sbr.rel (0) target = $region17
    $region16: #{tpu_custom_call.1} parent=1 // pred_region
      %54 = dma.done [#allocation4], 32
    $region17: #{tpu_custom_call.1} parent=1 // pred_fallthru
      _
    %55 = vsyncpa [#allocation3], 1
    %56 = vsyncpa [#allocation4], 1

</llo_original>
